<compile_context>
chip_gen: v7x
topology: tpu7x:2x2x1
jax: 0.10.0
libtpu: 0.0.40
codegen_flags: <defaults>
</compile_context>

<pallas_src>
import functools

import jax
import jax.numpy as jnp
from jax.experimental import pallas as pl
from jax.experimental.pallas import tpu as pltpu

BN_EPS = 1e-5


def _round_up(x, m):
    return (x + m - 1) // m * m


def mlp_kernel(x_ref, w1_ref, gamma_ref, beta_ref, w2_ref, b2_ref, o_ref, *,
               b_true):
    k = pl.program_id(0)

    # ---- Linear 1 (bf16 MXU operands, f32 accumulation) --------------------
    # b1 is omitted: BN with batch statistics is invariant to a per-feature
    # constant added before normalization (the mean absorbs it).
    h = jnp.dot(x_ref[...], w1_ref[...],
                preferred_element_type=jnp.float32)            # (Bp, TH) f32

    # ---- BatchNorm1d, training-mode (biased) batch statistics --------------
    inv_b = 1.0 / b_true
    # Zero-padded batch rows of x give exactly-zero rows of h (no bias added),
    # so summing over all Bp rows and scaling by 1/B is exact for the mean.
    mean = jnp.sum(h, axis=0, keepdims=True) * inv_b
    diff = h - mean
    if b_true != h.shape[0]:
        # Padded rows contribute (-mean) to diff; mask them out of the
        # variance with a single select pass.
        row = jax.lax.broadcasted_iota(jnp.int32, h.shape, 0)
        diff = jnp.where(row < b_true, diff, 0.0)
    var = jnp.sum(diff * diff, axis=0, keepdims=True) * inv_b

    # Fold gamma*rsqrt(var+eps) and beta-mean*scale into one FMA pass + ReLU.
    scale = gamma_ref[...] * jax.lax.rsqrt(var + BN_EPS)
    shift = beta_ref[...] - mean * scale
    h = jnp.maximum(h * scale + shift, 0.0).astype(jnp.bfloat16)

    # ---- Linear 2: reduce over H tiles directly into the resident f32 output
    partial = jnp.dot(h, w2_ref[...], preferred_element_type=jnp.float32)

    @pl.when(k == 0)
    def _():
        o_ref[...] = partial + b2_ref[...]       # b2 folded into first step

    @pl.when(k != 0)
    def _():
        o_ref[...] += partial


def prepare_params(params):
    """Pad + cast the weights once, outside the per-call hot path."""
    w1, b1, gamma, beta, w2, b2 = params
    del b1  # absorbed by batch-statistics BatchNorm (see kernel comment)
    D, H = w1.shape
    P = w2.shape[1]
    Dp = _round_up(D, 128)
    Hp = _round_up(H, 128)
    Pp = _round_up(P, 128)

    w1p = jnp.pad(w1, ((0, Dp - D), (0, Hp - H))).astype(jnp.bfloat16)
    gammap = jnp.pad(gamma, ((0, 0), (0, Hp - H)))
    betap = jnp.pad(beta, ((0, 0), (0, Hp - H)))
    w2p = jnp.pad(w2, ((0, Hp - H), (0, Pp - P))).astype(jnp.bfloat16)
    b2p = jnp.pad(b2, ((0, 0), (0, Pp - P)))
    return (w1p, gammap, betap, w2p, b2p, P)


def mlp_forward(x, prepared):
    w1p, gammap, betap, w2p, b2p, P = prepared
    B, D = x.shape
    Dp, Hp = w1p.shape
    Pp = w2p.shape[1]
    Bp = _round_up(B, 8)

    # Largest H tile that is a multiple of 128, divides Hp, and is <= 512.
    TH = next(c for c in range(min(Hp, 512), 0, -128) if Hp % c == 0)
    nH = Hp // TH

    xp = jnp.pad(x, ((0, Bp - B), (0, Dp - D))).astype(jnp.bfloat16)

    kernel = functools.partial(mlp_kernel, b_true=B)

    out = pl.pallas_call(
        kernel,
        out_shape=jax.ShapeDtypeStruct((Bp, Pp), jnp.float32),
        grid_spec=pltpu.PrefetchScalarGridSpec(
            num_scalar_prefetch=0,
            grid=(nH,),
            in_specs=[
                pl.BlockSpec((Bp, Dp), lambda k: (0, 0)),   # x (resident)
                pl.BlockSpec((Dp, TH), lambda k: (0, k)),   # w1 column tile
                pl.BlockSpec((1, TH), lambda k: (0, k)),    # gamma
                pl.BlockSpec((1, TH), lambda k: (0, k)),    # beta
                pl.BlockSpec((TH, Pp), lambda k: (k, 0)),   # w2 row tile
                pl.BlockSpec((1, Pp), lambda k: (0, 0)),    # b2 (resident)
            ],
            out_specs=pl.BlockSpec((Bp, Pp), lambda k: (0, 0)),  # resident acc
            scratch_shapes=[],
        ),
        compiler_params=pltpu.CompilerParams(
            dimension_semantics=("arbitrary",),
        ),
    )(xp, w1p, gammap, betap, w2p, b2p)

    return out[:B, :P]


def init_params(key, dim, hidden, proj):
    # PyTorch-style Linear init (uniform +-1/sqrt(fan_in)); BN gamma=1, beta=0.
    k1, k2, k3, k4 = jax.random.split(key, 4)
    bound1 = 1.0 / jnp.sqrt(dim)
    bound2 = 1.0 / jnp.sqrt(hidden)
    w1 = jax.random.uniform(k1, (dim, hidden), jnp.float32, -bound1, bound1)
    b1 = jax.random.uniform(k2, (1, hidden), jnp.float32, -bound1, bound1)
    gamma = jnp.ones((1, hidden), jnp.float32)
    beta = jnp.zeros((1, hidden), jnp.float32)
    w2 = jax.random.uniform(k3, (hidden, proj), jnp.float32, -bound2, bound2)
    b2 = jax.random.uniform(k4, (1, proj), jnp.float32, -bound2, bound2)
    return (w1, b1, gamma, beta, w2, b2)


def mlp_reference(x, params):
    # Mirrors the kernel's bf16-operand / f32-accumulate matmuls so the
    # comparison isolates the Pallas implementation, not the precision choice.
    # Note it keeps b1 (the kernel drops it; exact under batch-stat BN).
    w1, b1, gamma, beta, w2, b2 = params
    h = jnp.dot(x.astype(jnp.bfloat16), w1.astype(jnp.bfloat16),
                preferred_element_type=jnp.float32) + b1
    mean = jnp.mean(h, axis=0, keepdims=True)
    var = jnp.mean((h - mean) ** 2, axis=0, keepdims=True)
    h = (h - mean) * jax.lax.rsqrt(var + BN_EPS)
    h = h * gamma + beta
    h = jnp.maximum(h, 0.0)
    return jnp.dot(h.astype(jnp.bfloat16), w2.astype(jnp.bfloat16),
                   preferred_element_type=jnp.float32) + b2


def run_case(key, B, DIM, HIDDEN, PROJ):
    kx, kp = jax.random.split(key)
    x = jax.random.normal(kx, (B, DIM), jnp.float32)
    params = init_params(kp, DIM, HIDDEN, PROJ)
    prepared = prepare_params(params)

    out = jax.block_until_ready(mlp_forward(x, prepared))
    ref = mlp_reference(x, params)

    assert out.shape == (B, PROJ)
    assert jnp.allclose(out, ref, atol=2e-3, rtol=2e-3), (
        f"mismatch vs reference for B={B}, DIM={DIM}, H={HIDDEN}, P={PROJ}")


if __name__ == "__main__":
    key = jax.random.PRNGKey(0)
    k1, k2 = jax.random.split(key)

    # Case 1: unaligned shapes (B 30->32 exercises the masked-variance path,
    #         DIM 96->128, PROJ 80->128), single H tile (TH=384, nH=1).
    run_case(k1, B=30, DIM=96, HIDDEN=384, PROJ=80)

    # Case 2: aligned shapes with a multi-tile H reduction (Hp=1152 -> TH=384,
    #         nH=3) -> exercises the resident-output accumulation path.
    run_case(k2, B=32, DIM=128, HIDDEN=1152, PROJ=256)

    print("KERNEL_OK")
</pallas_src>

<mosaic_0001>
module attributes {stable_mosaic.version = 11 : i64} {
  func.func @mlp_kernel(%arg0: i32, %arg1: memref<32x128xbf16, #tpu.memory_space<vmem>>, %arg2: memref<128x384xbf16, #tpu.memory_space<vmem>>, %arg3: memref<1x384xf32, #tpu.memory_space<vmem>>, %arg4: memref<1x384xf32, #tpu.memory_space<vmem>>, %arg5: memref<384x128xbf16, #tpu.memory_space<vmem>>, %arg6: memref<1x128xf32, #tpu.memory_space<vmem>>, %arg7: memref<32x128xf32, #tpu.memory_space<vmem>>) attributes {dimension_semantics = [#tpu.dimension_semantics<arbitrary>], iteration_bounds = array<i64: 1>, scalar_prefetch = 0 : i64, scratch_operands = 0 : i64, tpu.core_type = #tpu.core_type<tc>, window_params = [{pipeline_mode = #tpu.pipeline_mode<synchronous>, transform_indices = @transform_0, window_bounds = array<i64: 32, 128>}, {transform_indices = @transform_1, window_bounds = array<i64: 128, 384>}, {transform_indices = @transform_2, window_bounds = array<i64: 1, 384>}, {transform_indices = @transform_3, window_bounds = array<i64: 1, 384>}, {transform_indices = @transform_4, window_bounds = array<i64: 384, 128>}, {pipeline_mode = #tpu.pipeline_mode<synchronous>, transform_indices = @transform_5, window_bounds = array<i64: 1, 128>}, {pipeline_mode = #tpu.pipeline_mode<synchronous>, transform_indices = @transform_6, window_bounds = array<i64: 32, 128>}]} {
    %c0 = arith.constant 0 : index
    %c0_0 = arith.constant 0 : index
    %0 = vector.load %arg1[%c0, %c0_0] : memref<32x128xbf16, #tpu.memory_space<vmem>>, vector<32x128xbf16>
    %c0_1 = arith.constant 0 : index
    %c0_2 = arith.constant 0 : index
    %1 = vector.load %arg2[%c0_1, %c0_2] : memref<128x384xbf16, #tpu.memory_space<vmem>>, vector<128x384xbf16>
    %cst = arith.constant dense<0.000000e+00> : vector<32x384xf32>
    %2 = tpu.matmul %0, %1, %cst {dimension_numbers = #tpu.dot_dimension_numbers<[1], [0], [0], [1], [0, 0, 1, 1], [], []>} : vector<32x128xbf16>, vector<128x384xbf16>, vector<32x384xf32> -> vector<32x384xf32>
    %cst_3 = arith.constant dense<0.000000e+00> : vector<384xf32>
    %3 = vector.multi_reduction <add>, %2, %cst_3 [0] : vector<32x384xf32> to vector<384xf32>
    %4 = vector.shape_cast %3 : vector<384xf32> to vector<1x384xf32>
    %cst_4 = arith.constant 0.0333333351 : f32
    %5 = vector.broadcast %cst_4 : f32 to vector<1x384xf32>
    %6 = arith.mulf %4, %5 : vector<1x384xf32>
    %7 = vector.broadcast %6 : vector<1x384xf32> to vector<32x384xf32>
    %8 = arith.subf %2, %7 : vector<32x384xf32>
    %9 = tpu.iota {dimensions = array<i32: 0>} : vector<32x384xi32>
    %c30_i32 = arith.constant 30 : i32
    %10 = vector.broadcast %c30_i32 : i32 to vector<32x384xi32>
    %11 = arith.cmpi slt, %9, %10 : vector<32x384xi32>
    %cst_5 = arith.constant 0.000000e+00 : f32
    %12 = vector.broadcast %cst_5 : f32 to vector<32x384xf32>
    %13 = arith.select %11, %8, %12 : vector<32x384xi1>, vector<32x384xf32>
    %14 = arith.mulf %13, %13 : vector<32x384xf32>
    %cst_6 = arith.constant dense<0.000000e+00> : vector<384xf32>
    %15 = vector.multi_reduction <add>, %14, %cst_6 [0] : vector<32x384xf32> to vector<384xf32>
    %16 = vector.shape_cast %15 : vector<384xf32> to vector<1x384xf32>
    %cst_7 = arith.constant 0.0333333351 : f32
    %17 = vector.broadcast %cst_7 : f32 to vector<1x384xf32>
    %18 = arith.mulf %16, %17 : vector<1x384xf32>
    %c0_8 = arith.constant 0 : index
    %c0_9 = arith.constant 0 : index
    %19 = vector.load %arg3[%c0_8, %c0_9] : memref<1x384xf32, #tpu.memory_space<vmem>>, vector<1x384xf32>
    %cst_10 = arith.constant 9.99999974E-6 : f32
    %20 = vector.broadcast %cst_10 : f32 to vector<1x384xf32>
    %21 = arith.addf %18, %20 : vector<1x384xf32>
    %22 = math.rsqrt %21 : vector<1x384xf32>
    %23 = arith.mulf %19, %22 : vector<1x384xf32>
    %c0_11 = arith.constant 0 : index
    %c0_12 = arith.constant 0 : index
    %24 = vector.load %arg4[%c0_11, %c0_12] : memref<1x384xf32, #tpu.memory_space<vmem>>, vector<1x384xf32>
    %25 = arith.mulf %6, %23 : vector<1x384xf32>
    %26 = arith.subf %24, %25 : vector<1x384xf32>
    %27 = vector.broadcast %23 : vector<1x384xf32> to vector<32x384xf32>
    %28 = arith.mulf %2, %27 : vector<32x384xf32>
    %29 = vector.broadcast %26 : vector<1x384xf32> to vector<32x384xf32>
    %30 = arith.addf %28, %29 : vector<32x384xf32>
    %cst_13 = arith.constant 0.000000e+00 : f32
    %31 = vector.broadcast %cst_13 : f32 to vector<32x384xf32>
    %32 = arith.maximumf %30, %31 : vector<32x384xf32>
    %33 = arith.truncf %32 : vector<32x384xf32> to vector<32x384xbf16>
    %c0_14 = arith.constant 0 : index
    %c0_15 = arith.constant 0 : index
    %34 = vector.load %arg5[%c0_14, %c0_15] : memref<384x128xbf16, #tpu.memory_space<vmem>>, vector<384x128xbf16>
    %cst_16 = arith.constant dense<0.000000e+00> : vector<32x128xf32>
    %35 = tpu.matmul %33, %34, %cst_16 {dimension_numbers = #tpu.dot_dimension_numbers<[1], [0], [0], [1], [0, 0, 1, 1], [], []>} : vector<32x384xbf16>, vector<384x128xbf16>, vector<32x128xf32> -> vector<32x128xf32>
    %c0_i32 = arith.constant 0 : i32
    %36 = arith.cmpi eq, %arg0, %c0_i32 : i32
    %37 = arith.extui %36 : i1 to i32
    %c0_i32_17 = arith.constant 0 : i32
    %38 = arith.cmpi ne, %37, %c0_i32_17 : i32
    scf.if %38 {
      %c0_20 = arith.constant 0 : index
      %c0_21 = arith.constant 0 : index
      %42 = vector.load %arg6[%c0_20, %c0_21] : memref<1x128xf32, #tpu.memory_space<vmem>>, vector<1x128xf32>
      %43 = vector.broadcast %42 : vector<1x128xf32> to vector<32x128xf32>
      %44 = arith.addf %35, %43 : vector<32x128xf32>
      %c0_22 = arith.constant 0 : index
      %c0_23 = arith.constant 0 : index
      %45 = vector.load %arg7[%c0_22, %c0_23] : memref<32x128xf32, #tpu.memory_space<vmem>>, vector<32x128xf32>
      tpu.vector_store %arg7[%c0_22, %c0_23], %44 {strides = array<i32>} : memref<32x128xf32, #tpu.memory_space<vmem>>, vector<32x128xf32>,
    } else {
    }
    %c0_i32_18 = arith.constant 0 : i32
    %39 = arith.cmpi ne, %arg0, %c0_i32_18 : i32
    %40 = arith.extui %39 : i1 to i32
    %c0_i32_19 = arith.constant 0 : i32
    %41 = arith.cmpi ne, %40, %c0_i32_19 : i32
    scf.if %41 {
      %c0_20 = arith.constant 0 : index
      %c0_21 = arith.constant 0 : index
      %42 = vector.load %arg7[%c0_20, %c0_21] : memref<32x128xf32, #tpu.memory_space<vmem>>, vector<32x128xf32>
      %43 = arith.addf %42, %35 : vector<32x128xf32>
      %c0_22 = arith.constant 0 : index
      %c0_23 = arith.constant 0 : index
      %44 = vector.load %arg7[%c0_22, %c0_23] : memref<32x128xf32, #tpu.memory_space<vmem>>, vector<32x128xf32>
      tpu.vector_store %arg7[%c0_22, %c0_23], %43 {strides = array<i32>} : memref<32x128xf32, #tpu.memory_space<vmem>>, vector<32x128xf32>,
    } else {
    }
    return
  }
  func.func @transform_0(%arg0: i32) -> (i32, i32) {
    %c0_i32 = arith.constant 0 : i32
    %c0_i32_0 = arith.constant 0 : i32
    %c0_i32_1 = arith.constant 0 : i32
    return %c0_i32, %c0_i32_0 : i32, i32
  }
  func.func @transform_1(%arg0: i32) -> (i32, i32) {
    %c0_i32 = arith.constant 0 : i32
    %c0_i32_0 = arith.constant 0 : i32
    return %c0_i32, %arg0 : i32, i32
  }
  func.func @transform_2(%arg0: i32) -> (i32, i32) {
    %c0_i32 = arith.constant 0 : i32
    %c0_i32_0 = arith.constant 0 : i32
    return %c0_i32, %arg0 : i32, i32
  }
  func.func @transform_3(%arg0: i32) -> (i32, i32) {
    %c0_i32 = arith.constant 0 : i32
    %c0_i32_0 = arith.constant 0 : i32
    return %c0_i32, %arg0 : i32, i32
  }
  func.func @transform_4(%arg0: i32) -> (i32, i32) {
    %c0_i32 = arith.constant 0 : i32
    %c0_i32_0 = arith.constant 0 : i32
    return %arg0, %c0_i32 : i32, i32
  }
  func.func @transform_5(%arg0: i32) -> (i32, i32) {
    %c0_i32 = arith.constant 0 : i32
    %c0_i32_0 = arith.constant 0 : i32
    %c0_i32_1 = arith.constant 0 : i32
    return %c0_i32, %c0_i32_0 : i32, i32
  }
  func.func @transform_6(%arg0: i32) -> (i32, i32) {
    %c0_i32 = arith.constant 0 : i32
    %c0_i32_0 = arith.constant 0 : i32
    %c0_i32_1 = arith.constant 0 : i32
    return %c0_i32, %c0_i32_0 : i32, i32
  }
}

</mosaic_0001>

<llo_original>
// kernel: tpu_custom_call.1
$region0: #{tpu_custom_call.1}
  #allocation0 [shape = 'u32[]', space=smem, size = 0x4, offset = 0x4, fixed_abs, tag = 'smem constant byte address 0x4 - core index']
  #allocation1 [shape = 'u32[144,128]{1,0:T(1,128)}', space=vmem, size = 0x12000, scoped, tag = 'internal scratch']
  %s0 = inlined_call_operand.hbm [shape: bf16[32,128], index: 0, kind: input, shape index: {}]
  %s1 = inlined_call_operand.hbm [shape: bf16[128,384], index: 1, kind: input, shape index: {}]
  %s2 = inlined_call_operand.vmem [shape: f32[1,384], index: 2, kind: input, shape index: {}]
  %s3 = inlined_call_operand.vmem [shape: f32[1,384], index: 3, kind: input, shape index: {}]
  %s4 = inlined_call_operand.hbm [shape: bf16[384,128], index: 4, kind: input, shape index: {}]
  %s5 = inlined_call_operand.vmem [shape: f32[1,128], index: 5, kind: input, shape index: {}]
  %s6 = inlined_call_operand.hbm [shape: f32[32,128], index: 6, kind: output, shape index: {}]
  %s7 = sld [smem:[#allocation0]]
  $region54: #{tpu_custom_call.1} parent=0
    _
  %s9 = ssub.s32 1, %s7
  %s10 = scalar_select 0, %s9, %s7
  $region1: #{tpu_custom_call.1} parent=0
    #allocation2 [shape = 'u8[8192]{0}', space=vmem, size = 0x2000, scoped, tag = 'input window, operand 0, single buffered']
    #allocation3 [shape = 's32[1]{0}', space=sflag, size = 0x4, scoped, tag = 'scoped memory for tpu_custom_call.1']
    #allocation4 [shape = 's32[1]{0}', space=sflag, size = 0x4, scoped, tag = 'scoped memory for tpu_custom_call.1']
    #allocation5 [shape = 'u8[98304]{0}', space=vmem, size = 0x18000, scoped, tag = 'input window, operand 1, single buffered']
    #allocation6 [shape = 's32[1]{0}', space=sflag, size = 0x4, scoped, tag = 'scoped memory for tpu_custom_call.1']
    #allocation7 [shape = 'u8[98304]{0}', space=vmem, size = 0x18000, scoped, tag = 'input window, operand 4, single buffered']
    #allocation8 [shape = 'u8[16384]{0}', space=vmem, size = 0x4000, scoped, tag = 'output window, operand 0, single buffered']
    %11 = vsyncpa [#allocation3], 0
    %12 = vsyncpa [#allocation6], 0
    %13 = vsyncpa [#allocation4], 0
    // Predicated region
    $region2: #{tpu_custom_call.1} parent=1 // pred_check
      _
    $region3: #{tpu_custom_call.1} parent=1 // pred_check_branch
      %15 = sbr.rel (0) target = $region5
    $region4: #{tpu_custom_call.1} parent=1 // pred_region
      %s17 = ssub.s32 256, 256
      %18 = vsyncadd [#allocation3], %s17
      %s19 = sshll.u32 [#allocation2], 4
      %s20 = int_to_ptr.vmem [resolvable:$true] %s19
      %25 = dma.hbm_to_vmem [thread:$0]  %s0, 256, %s20, [#allocation3], 64, 64, 4
    $region5: #{tpu_custom_call.1} parent=1 // pred_fallthru
      _
    // Predicated region
    $region6: #{tpu_custom_call.1} parent=1 // pred_check
      _
    $region7: #{tpu_custom_call.1} parent=1 // pred_check_branch
      %27 = sbr.rel (0) target = $region9
    $region8: #{tpu_custom_call.1} parent=1 // pred_region
      %s29 = ssub.s32 3072, 3072
      %30 = vsyncadd [#allocation6], %s29
      %s31 = sshll.u32 [#allocation5], 4
      %s32 = int_to_ptr.vmem [resolvable:$true] %s31
      %37 = dma.hbm_to_vmem [thread:$0]  %s1, 3072, %s32, [#allocation6], 192, 192, 12
    $region9: #{tpu_custom_call.1} parent=1 // pred_fallthru
      _
    // Predicated region
    $region10: #{tpu_custom_call.1} parent=1 // pred_check
      _
    $region11: #{tpu_custom_call.1} parent=1 // pred_check_branch
      %39 = sbr.rel (0) target = $region13
    $region12: #{tpu_custom_call.1} parent=1 // pred_region
      _
    $region13: #{tpu_custom_call.1} parent=1 // pred_fallthru
      _
    // Predicated region
    $region14: #{tpu_custom_call.1} parent=1 // pred_check
      _
    $region15: #{tpu_custom_call.1} parent=1 // pred_check_branch
      %41 = sbr.rel (0) target = $region17
    $region16: #{tpu_custom_call.1} parent=1 // pred_region
      _
    $region17: #{tpu_custom_call.1} parent=1 // pred_fallthru
      _
    // Predicated region
    $region18: #{tpu_custom_call.1} parent=1 // pred_check
      _
    $region19: #{tpu_custom_call.1} parent=1 // pred_check_branch
      %43 = sbr.rel (0) target = $region21
    $region20: #{tpu_custom_call.1} parent=1 // pred_region
      %s45 = ssub.s32 3072, 3072
      %46 = vsyncadd [#allocation6], %s45
      %s47 = sshll.u32 [#allocation7], 4
      %s48 = int_to_ptr.vmem [resolvable:$true] %s47
      %53 = dma.hbm_to_vmem [thread:$0]  %s4, 3072, %s48, [#allocation6], 64, 64, 4
    $region21: #{tpu_custom_call.1} parent=1 // pred_fallthru
      _
    // Predicated region
    $region22: #{tpu_custom_call.1} parent=1 // pred_check
      _
    $region23: #{tpu_custom_call.1} parent=1 // pred_check_branch
      %55 = sbr.rel (0) target = $region25
    $region24: #{tpu_custom_call.1} parent=1 // pred_region
      _
    $region25: #{tpu_custom_call.1} parent=1 // pred_fallthru
      _
    // Predicated region
    $region26: #{tpu_custom_call.1} parent=1 // pred_check
      _
    $region27: #{tpu_custom_call.1} parent=1 // pred_check_branch
      %57 = sbr.rel (0) target = $region29
    $region28: #{tpu_custom_call.1} parent=1 // pred_region
      %58 = dma.done [#allocation3], 256
    $region29: #{tpu_custom_call.1} parent=1 // pred_fallthru
      _
    // Predicated region
    $region30: #{tpu_custom_call.1} parent=1 // pred_check
      _
    $region31: #{tpu_custom_call.1} parent=1 // pred_check_branch
      %60 = sbr.rel (0) target = $region33
    $region32: #{tpu_custom_call.1} parent=1 // pred_region
      %61 = dma.done [#allocation6], 3072
    $region33: #{tpu_custom_call.1} parent=1 // pred_fallthru
      _
    // Predicated region
    $region34: #{tpu_custom_call.1} parent=1 // pred_check
      _
    $region35: #{tpu_custom_call.1} parent=1 // pred_check_branch
      %63 = sbr.rel (0) target = $region37
    $region36: #{tpu_custom_call.1} parent=1 // pred_region
      %64 = dma.done [#allocation6], 3072
    $region37: #{tpu_custom_call.1} parent=1 // pred_fallthru
      _
    %v66 = vld [vmem:[#allocation2] sm:$0xf]
    %v67 = vld [vmem:[#allocation2 + $0x4] sm:$0xf]
    %v68 = vld [vmem:[#allocation2 + $0x8] sm:$0xf]
    %v69 = vld [vmem:[#allocation2 + $0xc] sm:$0xf]
    %v70 = vld [vmem:[#allocation5] sm:$0xff]
    %v71 = vld [vmem:[#allocation5 + $0x8] sm:$0xf]
    %v72 = vld [vmem:[#allocation5 + $0xc] sm:$0xff]
    %v73 = vld [vmem:[#allocation5 + $0x14] sm:$0xf]
    %v74 = vld [vmem:[#allocation5 + $0x18] sm:$0xff]
    %v75 = vld [vmem:[#allocation5 + $0x20] sm:$0xf]
    %v76 = vld [vmem:[#allocation5 + $0x24] sm:$0xff]
    %v77 = vld [vmem:[#allocation5 + $0x2c] sm:$0xf]
    %v78 = vld [vmem:[#allocation5 + $0x30] sm:$0xff]
    %v79 = vld [vmem:[#allocation5 + $0x38] sm:$0xf]
    %v80 = vld [vmem:[#allocation5 + $0x3c] sm:$0xff]
    %v81 = vld [vmem:[#allocation5 + $0x44] sm:$0xf]
    %v82 = vld [vmem:[#allocation5 + $0x48] sm:$0xff]
    %v83 = vld [vmem:[#allocation5 + $0x50] sm:$0xf]
    %v84 = vld [vmem:[#allocation5 + $0x54] sm:$0xff]
    %v85 = vld [vmem:[#allocation5 + $0x5c] sm:$0xf]
    %v86 = vld [vmem:[#allocation5 + $0x60] sm:$0xff]
    %v87 = vld [vmem:[#allocation5 + $0x68] sm:$0xf]
    %v88 = vld [vmem:[#allocation5 + $0x6c] sm:$0xff]
    %v89 = vld [vmem:[#allocation5 + $0x74] sm:$0xf]
    %v90 = vld [vmem:[#allocation5 + $0x78] sm:$0xff]
    %v91 = vld [vmem:[#allocation5 + $0x80] sm:$0xf]
    %v92 = vld [vmem:[#allocation5 + $0x84] sm:$0xff]
    %v93 = vld [vmem:[#allocation5 + $0x8c] sm:$0xf]
    %v94 = vld [vmem:[#allocation5 + $0x90] sm:$0xff]
    %v95 = vld [vmem:[#allocation5 + $0x98] sm:$0xf]
    %v96 = vld [vmem:[#allocation5 + $0x9c] sm:$0xff]
    %v97 = vld [vmem:[#allocation5 + $0xa4] sm:$0xf]
    %v98 = vld [vmem:[#allocation5 + $0xa8] sm:$0xff]
    %v99 = vld [vmem:[#allocation5 + $0xb0] sm:$0xf]
    %v100 = vld [vmem:[#allocation5 + $0xb4] sm:$0xff]
    %v101 = vld [vmem:[#allocation5 + $0xbc] sm:$0xf]
    %v106 = vunpack.c.l.b16 %v66
    %v107 = vunpack.c.l.b16 %v67
    %v108 = vunpack.c.l.b16 %v68
    %v109 = vunpack.c.l.b16 %v69
    %v110 = vpack.c.b16 %v107, %v106
    %v111 = vpack.c.b16 %v109, %v108
    %v146 = vunpack.c.l.b16 %v70
    %v147 = vunpack.c.h.b16 %v70
    %v148 = vunpack.c.l.b16 %v71
    %v149 = vunpack.c.l.b16 %v72
    %v150 = vunpack.c.h.b16 %v72
    %v151 = vunpack.c.l.b16 %v73
    %v152 = vunpack.c.l.b16 %v74
    %v153 = vunpack.c.h.b16 %v74
    %v154 = vunpack.c.l.b16 %v75
    %v155 = vunpack.c.l.b16 %v76
    %v156 = vunpack.c.h.b16 %v76
    %v157 = vunpack.c.l.b16 %v77
    %v158 = vunpack.c.l.b16 %v78
    %v159 = vunpack.c.h.b16 %v78
    %v160 = vunpack.c.l.b16 %v79
    %v161 = vunpack.c.l.b16 %v80
    %v162 = vunpack.c.h.b16 %v80
    %v163 = vunpack.c.l.b16 %v81
    %v164 = vunpack.c.l.b16 %v82
    %v165 = vunpack.c.h.b16 %v82
    %v166 = vunpack.c.l.b16 %v83
    %v167 = vunpack.c.l.b16 %v84
    %v168 = vunpack.c.h.b16 %v84
    %v169 = vunpack.c.l.b16 %v85
    %v170 = vunpack.c.l.b16 %v86
    %v171 = vunpack.c.h.b16 %v86
    %v172 = vunpack.c.l.b16 %v87
    %v173 = vunpack.c.l.b16 %v88
    %v174 = vunpack.c.h.b16 %v88
    %v175 = vunpack.c.l.b16 %v89
    %v176 = vunpack.c.l.b16 %v90
    %v177 = vunpack.c.h.b16 %v90
    %v178 = vunpack.c.l.b16 %v91
    %v179 = vunpack.c.l.b16 %v92
    %v180 = vunpack.c.h.b16 %v92
    %v181 = vunpack.c.l.b16 %v93
    %v182 = vunpack.c.l.b16 %v94
    %v183 = vunpack.c.h.b16 %v94
    %v184 = vunpack.c.l.b16 %v95
    %v185 = vunpack.c.l.b16 %v96
    %v186 = vunpack.c.h.b16 %v96
    %v187 = vunpack.c.l.b16 %v97
    %v188 = vunpack.c.l.b16 %v98
    %v189 = vunpack.c.h.b16 %v98
    %v190 = vunpack.c.l.b16 %v99
    %v191 = vunpack.c.l.b16 %v100
    %v192 = vunpack.c.h.b16 %v100
    %v193 = vunpack.c.l.b16 %v101
    %v194 = vpack.c.b16 %v149, %v146
    %v195 = vpack.c.b16 %v150, %v147
    %v196 = vpack.c.b16 %v151, %v148
    %v197 = vpack.c.b16 %v155, %v152
    %v198 = vpack.c.b16 %v156, %v153
    %v199 = vpack.c.b16 %v157, %v154
    %v200 = vpack.c.b16 %v161, %v158
    %v201 = vpack.c.b16 %v162, %v159
    %v202 = vpack.c.b16 %v163, %v160
    %v203 = vpack.c.b16 %v167, %v164
    %v204 = vpack.c.b16 %v168, %v165
    %v205 = vpack.c.b16 %v169, %v166
    %v206 = vpack.c.b16 %v173, %v170
    %v207 = vpack.c.b16 %v174, %v171
    %v208 = vpack.c.b16 %v175, %v172
    %v209 = vpack.c.b16 %v179, %v176
    %v210 = vpack.c.b16 %v180, %v177
    %v211 = vpack.c.b16 %v181, %v178
    %v212 = vpack.c.b16 %v185, %v182
    %v213 = vpack.c.b16 %v186, %v183
    %v214 = vpack.c.b16 %v187, %v184
    %v215 = vpack.c.b16 %v191, %v188
    %v216 = vpack.c.b16 %v192, %v189
    %v217 = vpack.c.b16 %v193, %v190
    %242 = vmatprep.subr.bf16.mxu0 %v195
    %243 = vmatpush1.bf16.msra.mxu0 %v194
    %244 = vmatprep.subr.bf16.mxu0 %v198
    %245 = vmatpush1.bf16.msra.mxu0 %v197
    %246 = vmatprep.subr.bf16.mxu0 %v201
    %247 = vmatpush1.bf16.msra.mxu0 %v200
    %248 = vmatprep.subr.bf16.mxu0 %v204
    %249 = vmatpush1.bf16.msra.mxu0 %v203
    %250 = vmatprep.subr.bf16.mxu0 %v207
    %251 = vmatpush1.bf16.msra.mxu0 %v206
    %252 = vmatprep.subr.bf16.mxu0 %v210
    %253 = vmatpush1.bf16.msra.mxu0 %v209
    %254 = vmatprep.subr.bf16.mxu0 %v213
    %255 = vmatpush1.bf16.msra.mxu0 %v212
    %256 = vmatprep.subr.bf16.mxu0 %v216
    %257 = vmatpush1.bf16.msra.mxu0 %v215
    %258 = vmatprep.subr.bf16.mxu0 0
    %259 = vmatpush1.bf16.msra.mxu0 0
    %260 = vmatprep.subr.bf16.mxu0 0
    %261 = vmatpush1.bf16.msra.mxu0 0
    %262 = vmatprep.subr.bf16.mxu0 0
    %263 = vmatpush1.bf16.msra.mxu0 0
    %264 = vmatprep.subr.bf16.mxu0 0
    %265 = vmatpush1.bf16.msra.mxu0 0
    %266 = vmatprep.subr.bf16.mxu0 0
    %267 = vmatpush1.bf16.msra.mxu0 0
    %268 = vmatprep.subr.bf16.mxu0 0
    %269 = vmatpush1.bf16.msra.mxu0 0
    %270 = vmatprep.subr.bf16.mxu0 0
    %271 = vmatpush1.bf16.msra.mxu0 0
    %272 = vmatprep.subr.bf16.mxu0 0
    %273 = vmatpush1.bf16.msra.mxu0 0
    %274 = vmatprep.mubr.bf16.mxu0 0
    %275 = vmatmul.mubr.bf16.gmra.mrb[0].mxu0 %v110
    %v276 = vpop.f32.mrb[0].mxu0
    %v277 = vadd.f32 0.0, %v276
    %v278 = vpop.f32.mrb[0].mxu0
    %v279 = vadd.f32 0.0, %v278
    %v280 = vpop.f32.mrb[0].mxu0
    %v281 = vadd.f32 0.0, %v280
    %v282 = vpop.f32.mrb[0].mxu0
    %v283 = vadd.f32 0.0, %v282
    %284 = vmatprep.mubr.bf16.mxu0 0
    %285 = vmatmul.mubr.bf16.gmra.mrb[0].mxu0 %v111
    %v286 = vpop.f32.mrb[0].mxu0
    %v287 = vadd.f32 0.0, %v286
    %v288 = vpop.f32.mrb[0].mxu0
    %v289 = vadd.f32 0.0, %v288
    %v290 = vpop.f32.mrb[0].mxu0
    %v291 = vadd.f32 0.0, %v290
    %v292 = vpop.f32.mrb[0].mxu0
    %v293 = vadd.f32 0.0, %v292
    %294 = vdwg.mxu0
    %295 = vmatprep.subr.bf16.mxu0 0
    %296 = vmatpush1.bf16.msra.mxu0 %v196
    %297 = vmatprep.subr.bf16.mxu0 0
    %298 = vmatpush1.bf16.msra.mxu0 %v199
    %299 = vmatprep.subr.bf16.mxu0 0
    %300 = vmatpush1.bf16.msra.mxu0 %v202
    %301 = vmatprep.subr.bf16.mxu0 0
    %302 = vmatpush1.bf16.msra.mxu0 %v205
    %303 = vmatprep.subr.bf16.mxu0 0
    %304 = vmatpush1.bf16.msra.mxu0 %v208
    %305 = vmatprep.subr.bf16.mxu0 0
    %306 = vmatpush1.bf16.msra.mxu0 %v211
    %307 = vmatprep.subr.bf16.mxu0 0
    %308 = vmatpush1.bf16.msra.mxu0 %v214
    %309 = vmatprep.subr.bf16.mxu0 0
    %310 = vmatpush1.bf16.msra.mxu0 %v217
    %311 = vmatprep.subr.bf16.mxu0 0
    %312 = vmatpush1.bf16.msra.mxu0 0
    %313 = vmatprep.subr.bf16.mxu0 0
    %314 = vmatpush1.bf16.msra.mxu0 0
    %315 = vmatprep.subr.bf16.mxu0 0
    %316 = vmatpush1.bf16.msra.mxu0 0
    %317 = vmatprep.subr.bf16.mxu0 0
    %318 = vmatpush1.bf16.msra.mxu0 0
    %319 = vmatprep.subr.bf16.mxu0 0
    %320 = vmatpush1.bf16.msra.mxu0 0
    %321 = vmatprep.subr.bf16.mxu0 0
    %322 = vmatpush1.bf16.msra.mxu0 0
    %323 = vmatprep.subr.bf16.mxu0 0
    %324 = vmatpush1.bf16.msra.mxu0 0
    %325 = vmatprep.subr.bf16.mxu0 0
    %326 = vmatpush1.bf16.msra.mxu0 0
    %327 = vmatprep.mubr.bf16.mxu0 0
    %328 = vmatmul.mubr.bf16.gmra.mrb[0].mxu0 %v110
    %v329 = vpop.f32.mrb[0].mxu0
    %v330 = vadd.f32 0.0, %v329
    %v331 = vpop.f32.mrb[0].mxu0
    %v332 = vpop.f32.mrb[0].mxu0
    %v333 = vadd.f32 0.0, %v332
    %v334 = vpop.f32.mrb[0].mxu0
    %335 = vmatprep.mubr.bf16.mxu0 0
    %336 = vmatmul.mubr.bf16.gmra.mrb[0].mxu0 %v111
    %v337 = vpop.f32.mrb[0].mxu0
    %v338 = vadd.f32 0.0, %v337
    %v339 = vpop.f32.mrb[0].mxu0
    %v340 = vpop.f32.mrb[0].mxu0
    %v341 = vadd.f32 0.0, %v340
    %v342 = vpop.f32.mrb[0].mxu0
    %343 = vdwg.mxu0
    %v344 = vadd.f32 %v277, %v281
    %v345 = vadd.f32 %v344, %v287
    %v346 = vadd.f32 %v345, %v291
    %v347 = vrot.slane %v346, 4
    %v348 = vadd.f32 %v346, %v347
    %v349 = vrot.slane %v348, 2
    %v350 = vadd.f32 %v348, %v349
    %v351 = vrot.slane %v350, 1
    %v352 = vadd.f32 %v350, %v351
    %v353 = vadd.f32 %v279, %v283
    %v354 = vadd.f32 %v353, %v289
    %v355 = vadd.f32 %v354, %v293
    %v356 = vrot.slane %v355, 4
    %v357 = vadd.f32 %v355, %v356
    %v358 = vrot.slane %v357, 2
    %v359 = vadd.f32 %v357, %v358
    %v360 = vrot.slane %v359, 1
    %v361 = vadd.f32 %v359, %v360
    %v362 = vadd.f32 %v330, %v333
    %v363 = vadd.f32 %v362, %v338
    %v364 = vadd.f32 %v363, %v341
    %v365 = vrot.slane %v364, 4
    %v366 = vadd.f32 %v364, %v365
    %v367 = vrot.slane %v366, 2
    %v368 = vadd.f32 %v366, %v367
    %v369 = vrot.slane %v368, 1
    %v370 = vadd.f32 %v368, %v369
    %v371 = vmul.f32 %v352, 0.033333335
    %v372 = vmul.f32 %v361, 0.033333335
    %v373 = vmul.f32 %v370, 0.033333335
    %v374 = vsub.f32 %v277, %v371
    %v375 = vsub.f32 %v279, %v372
    %v376 = vsub.f32 %v330, %v373
    %v377 = vsub.f32 %v281, %v371
    %v378 = vsub.f32 %v283, %v372
    %v379 = vsub.f32 %v333, %v373
    %v380 = vsub.f32 %v287, %v371
    %v381 = vsub.f32 %v289, %v372
    %v382 = vsub.f32 %v338, %v373
    %v383 = vsub.f32 %v291, %v371
    %v384 = vsub.f32 %v293, %v372
    %v385 = vsub.f32 %v341, %v373
    %v386 = vlaneseq
    %v387 = vshrl.u32 %v386, 7
    %v388 = vadd.s32 %v387, 8
    %v389 = vadd.s32 %v387, 16
    %v390 = vadd.s32 %v387, 24
    %vm391 = vcmp.lt.s32.totalorder %v387, 30
    %vm392 = vcmp.lt.s32.totalorder %v388, 30
    %vm393 = vcmp.lt.s32.totalorder %v389, 30
    %vm394 = vcmp.lt.s32.totalorder %v390, 30
    %v395 = vsel %vm391, %v374, 0.0
    %v396 = vsel %vm391, %v375, 0.0
    %v397 = vsel %vm391, %v376, 0.0
    %v398 = vsel %vm392, %v377, 0.0
    %v399 = vsel %vm392, %v378, 0.0
    %v400 = vsel %vm392, %v379, 0.0
    %v401 = vsel %vm393, %v380, 0.0
    %v402 = vsel %vm393, %v381, 0.0
    %v403 = vsel %vm393, %v382, 0.0
    %v404 = vsel %vm394, %v383, 0.0
    %v405 = vsel %vm394, %v384, 0.0
    %v406 = vsel %vm394, %v385, 0.0
    %v407 = vmul.f32 %v395, %v395
    %v408 = vmul.f32 %v396, %v396
    %v409 = vmul.f32 %v397, %v397
    %v410 = vmul.f32 %v398, %v398
    %v411 = vmul.f32 %v399, %v399
    %v412 = vmul.f32 %v400, %v400
    %v413 = vmul.f32 %v401, %v401
    %v414 = vmul.f32 %v402, %v402
    %v415 = vmul.f32 %v403, %v403
    %v416 = vmul.f32 %v404, %v404
    %v417 = vmul.f32 %v405, %v405
    %v418 = vmul.f32 %v406, %v406
    %v419 = vadd.f32 %v407, %v410
    %v420 = vadd.f32 %v419, %v413
    %v421 = vadd.f32 %v420, %v416
    %v422 = vrot.slane %v421, 4
    %v423 = vadd.f32 %v421, %v422
    %v424 = vrot.slane %v423, 2
    %v425 = vadd.f32 %v423, %v424
    %v426 = vrot.slane %v425, 1
    %v427 = vadd.f32 %v425, %v426
    %v428 = vadd.f32 %v408, %v411
    %v429 = vadd.f32 %v428, %v414
    %v430 = vadd.f32 %v429, %v417
    %v431 = vrot.slane %v430, 4
    %v432 = vadd.f32 %v430, %v431
    %v433 = vrot.slane %v432, 2
    %v434 = vadd.f32 %v432, %v433
    %v435 = vrot.slane %v434, 1
    %v436 = vadd.f32 %v434, %v435
    %v437 = vadd.f32 %v409, %v412
    %v438 = vadd.f32 %v437, %v415
    %v439 = vadd.f32 %v438, %v418
    %v440 = vrot.slane %v439, 4
    %v441 = vadd.f32 %v439, %v440
    %v442 = vrot.slane %v441, 2
    %v443 = vadd.f32 %v441, %v442
    %v444 = vrot.slane %v443, 1
    %v445 = vadd.f32 %v443, %v444
    %v446 = vmul.f32 %v427, 0.033333335
    %v447 = vmul.f32 %v436, 0.033333335
    %v448 = vmul.f32 %v445, 0.033333335
    %v449 = vld [vmem:[%s2] sm:$0x7]
    %v450 = vadd.f32 %v446, 1e-05
    %v451 = vadd.f32 %v447, 1e-05
    %v452 = vadd.f32 %v448, 1e-05
    %v453 = vrsqrt.pop %v450
    %v454 = vrsqrt.pop %v451
    %v455 = vrsqrt.pop %v452
    %v459 = vcombine.low %v453, %v454
    %v461 = vunpack.c.l.s4 1966171168
    %v462 = vunpack.c.0.s8 %v461
    %v463 = vlaneseq
    %v464 = vshrl.u32 %v463, 7
    %v465 = vsub.s32 %v462, %v464
    %v466 = vrot.slane %v459, %v465
    %v468 = vunpack.c.l.s4 1966171168
    %v469 = vunpack.c.0.s8 %v468
    %v470 = vlaneseq
    %v471 = vshrl.u32 %v470, 7
    %v472 = vsub.s32 %v469, %v471
    %v473 = vrot.slane %v455, %v472
    %v474 = vcombine.low %v466, %v473
    %v476 = vunpack.c.l.s4 1966171168
    %v477 = vunpack.c.0.s8 %v476
    %v478 = vlaneseq
    %v479 = vshrl.u32 %v478, 7
    %v480 = vsub.s32 %v477, %v479
    %v481 = vrot.slane %v474, %v480
    %v483 = vmul.f32 %v449, %v481
    %v484 = vld [vmem:[%s3] sm:$0x7]
    %v486 = vlaneseq
    %v487 = vshrl.u32 %v486, 7
    %v488 = vsub.s32 0, %v487
    %v489 = vrot.slane %v483, %v488
    %v490 = vlaneseq
    %v491 = vshrl.u32 %v490, 7
    %v492 = vsub.s32 1, %v491
    %v493 = vrot.slane %v483, %v492
    %v494 = vlaneseq
    %v495 = vshrl.u32 %v494, 7
    %v496 = vsub.s32 2, %v495
    %v497 = vrot.slane %v483, %v496
    %v501 = vmul.f32 %v371, %v489
    %v502 = vmul.f32 %v372, %v493
    %v503 = vmul.f32 %v373, %v497
    %v507 = vcombine.low %v501, %v502
    %v509 = vunpack.c.l.s4 1966171168
    %v510 = vunpack.c.0.s8 %v509
    %v511 = vlaneseq
    %v512 = vshrl.u32 %v511, 7
    %v513 = vsub.s32 %v510, %v512
    %v514 = vrot.slane %v507, %v513
    %v516 = vunpack.c.l.s4 1966171168
    %v517 = vunpack.c.0.s8 %v516
    %v518 = vlaneseq
    %v519 = vshrl.u32 %v518, 7
    %v520 = vsub.s32 %v517, %v519
    %v521 = vrot.slane %v503, %v520
    %v522 = vcombine.low %v514, %v521
    %v524 = vunpack.c.l.s4 1966171168
    %v525 = vunpack.c.0.s8 %v524
    %v526 = vlaneseq
    %v527 = vshrl.u32 %v526, 7
    %v528 = vsub.s32 %v525, %v527
    %v529 = vrot.slane %v522, %v528
    %v531 = vsub.f32 %v484, %v529
    %v532 = vmul.f32 %v277, %v489
    %v533 = vmul.f32 %v279, %v493
    %v534 = vmul.f32 %v330, %v497
    %v535 = vmul.f32 %v281, %v489
    %v536 = vmul.f32 %v283, %v493
    %v537 = vmul.f32 %v333, %v497
    %v538 = vmul.f32 %v287, %v489
    %v539 = vmul.f32 %v289, %v493
    %v540 = vmul.f32 %v338, %v497
    %v541 = vmul.f32 %v291, %v489
    %v542 = vmul.f32 %v293, %v493
    %v543 = vmul.f32 %v341, %v497
    %v545 = vlaneseq
    %v546 = vshrl.u32 %v545, 7
    %v547 = vsub.s32 0, %v546
    %v548 = vrot.slane %v531, %v547
    %v549 = vlaneseq
    %v550 = vshrl.u32 %v549, 7
    %v551 = vsub.s32 1, %v550
    %v552 = vrot.slane %v531, %v551
    %v553 = vlaneseq
    %v554 = vshrl.u32 %v553, 7
    %v555 = vsub.s32 2, %v554
    %v556 = vrot.slane %v531, %v555
    %v560 = vadd.f32 %v532, %v548
    %v561 = vadd.f32 %v533, %v552
    %v562 = vadd.f32 %v534, %v556
    %v563 = vadd.f32 %v535, %v548
    %v564 = vadd.f32 %v536, %v552
    %v565 = vadd.f32 %v537, %v556
    %v566 = vadd.f32 %v538, %v548
    %v567 = vadd.f32 %v539, %v552
    %v568 = vadd.f32 %v540, %v556
    %v569 = vadd.f32 %v541, %v548
    %v570 = vadd.f32 %v542, %v552
    %v571 = vadd.f32 %v543, %v556
    %v572 = vmax.f32 %v560, 0.0
    %v573 = vmax.f32 %v561, 0.0
    %v574 = vmax.f32 %v562, 0.0
    %v575 = vmax.f32 %v563, 0.0
    %v576 = vmax.f32 %v564, 0.0
    %v577 = vmax.f32 %v565, 0.0
    %v578 = vmax.f32 %v566, 0.0
    %v579 = vmax.f32 %v567, 0.0
    %v580 = vmax.f32 %v568, 0.0
    %v581 = vmax.f32 %v569, 0.0
    %v582 = vmax.f32 %v570, 0.0
    %v583 = vmax.f32 %v571, 0.0
    %v584 = vpack.c.bf16 %v575, %v572
    %v585 = vpack.c.bf16 %v576, %v573
    %v586 = vpack.c.bf16 %v577, %v574
    %v587 = vpack.c.bf16 %v581, %v578
    %v588 = vpack.c.bf16 %v582, %v579
    %v589 = vpack.c.bf16 %v583, %v580
    %v590 = vld [vmem:[#allocation7] sm:$0xf]
    %v591 = vld [vmem:[#allocation7 + $0x4] sm:$0xf]
    %v592 = vld [vmem:[#allocation7 + $0x8] sm:$0xf]
    %v593 = vld [vmem:[#allocation7 + $0xc] sm:$0xf]
    %v594 = vld [vmem:[#allocation7 + $0x10] sm:$0xf]
    %v595 = vld [vmem:[#allocation7 + $0x14] sm:$0xf]
    %v596 = vld [vmem:[#allocation7 + $0x18] sm:$0xf]
    %v597 = vld [vmem:[#allocation7 + $0x1c] sm:$0xf]
    %v598 = vld [vmem:[#allocation7 + $0x20] sm:$0xf]
    %v599 = vld [vmem:[#allocation7 + $0x24] sm:$0xf]
    %v600 = vld [vmem:[#allocation7 + $0x28] sm:$0xf]
    %v601 = vld [vmem:[#allocation7 + $0x2c] sm:$0xf]
    %v602 = vld [vmem:[#allocation7 + $0x30] sm:$0xf]
    %v603 = vld [vmem:[#allocation7 + $0x34] sm:$0xf]
    %v604 = vld [vmem:[#allocation7 + $0x38] sm:$0xf]
    %v605 = vld [vmem:[#allocation7 + $0x3c] sm:$0xf]
    %v606 = vld [vmem:[#allocation7 + $0x40] sm:$0xf]
    %v607 = vld [vmem:[#allocation7 + $0x44] sm:$0xf]
    %v608 = vld [vmem:[#allocation7 + $0x48] sm:$0xf]
    %v609 = vld [vmem:[#allocation7 + $0x4c] sm:$0xf]
    %v610 = vld [vmem:[#allocation7 + $0x50] sm:$0xf]
    %v611 = vld [vmem:[#allocation7 + $0x54] sm:$0xf]
    %v612 = vld [vmem:[#allocation7 + $0x58] sm:$0xf]
    %v613 = vld [vmem:[#allocation7 + $0x5c] sm:$0xf]
    %v614 = vld [vmem:[#allocation7 + $0x60] sm:$0xf]
    %v615 = vld [vmem:[#allocation7 + $0x64] sm:$0xf]
    %v616 = vld [vmem:[#allocation7 + $0x68] sm:$0xf]
    %v617 = vld [vmem:[#allocation7 + $0x6c] sm:$0xf]
    %v618 = vld [vmem:[#allocation7 + $0x70] sm:$0xf]
    %v619 = vld [vmem:[#allocation7 + $0x74] sm:$0xf]
    %v620 = vld [vmem:[#allocation7 + $0x78] sm:$0xf]
    %v621 = vld [vmem:[#allocation7 + $0x7c] sm:$0xf]
    %v622 = vld [vmem:[#allocation7 + $0x80] sm:$0xf]
    %v623 = vld [vmem:[#allocation7 + $0x84] sm:$0xf]
    %v624 = vld [vmem:[#allocation7 + $0x88] sm:$0xf]
    %v625 = vld [vmem:[#allocation7 + $0x8c] sm:$0xf]
    %v626 = vld [vmem:[#allocation7 + $0x90] sm:$0xf]
    %v627 = vld [vmem:[#allocation7 + $0x94] sm:$0xf]
    %v628 = vld [vmem:[#allocation7 + $0x98] sm:$0xf]
    %v629 = vld [vmem:[#allocation7 + $0x9c] sm:$0xf]
    %v630 = vld [vmem:[#allocation7 + $0xa0] sm:$0xf]
    %v631 = vld [vmem:[#allocation7 + $0xa4] sm:$0xf]
    %v632 = vld [vmem:[#allocation7 + $0xa8] sm:$0xf]
    %v633 = vld [vmem:[#allocation7 + $0xac] sm:$0xf]
    %v634 = vld [vmem:[#allocation7 + $0xb0] sm:$0xf]
    %v635 = vld [vmem:[#allocation7 + $0xb4] sm:$0xf]
    %v636 = vld [vmem:[#allocation7 + $0xb8] sm:$0xf]
    %v637 = vld [vmem:[#allocation7 + $0xbc] sm:$0xf]
    %v686 = vunpack.c.l.b16 %v590
    %v687 = vunpack.c.l.b16 %v591
    %v688 = vunpack.c.l.b16 %v592
    %v689 = vunpack.c.l.b16 %v593
    %v690 = vunpack.c.l.b16 %v594
    %v691 = vunpack.c.l.b16 %v595
    %v692 = vunpack.c.l.b16 %v596
    %v693 = vunpack.c.l.b16 %v597
    %v694 = vunpack.c.l.b16 %v598
    %v695 = vunpack.c.l.b16 %v599
    %v696 = vunpack.c.l.b16 %v600
    %v697 = vunpack.c.l.b16 %v601
    %v698 = vunpack.c.l.b16 %v602
    %v699 = vunpack.c.l.b16 %v603
    %v700 = vunpack.c.l.b16 %v604
    %v701 = vunpack.c.l.b16 %v605
    %v702 = vunpack.c.l.b16 %v606
    %v703 = vunpack.c.l.b16 %v607
    %v704 = vunpack.c.l.b16 %v608
    %v705 = vunpack.c.l.b16 %v609
    %v706 = vunpack.c.l.b16 %v610
    %v707 = vunpack.c.l.b16 %v611
    %v708 = vunpack.c.l.b16 %v612
    %v709 = vunpack.c.l.b16 %v613
    %v710 = vunpack.c.l.b16 %v614
    %v711 = vunpack.c.l.b16 %v615
    %v712 = vunpack.c.l.b16 %v616
    %v713 = vunpack.c.l.b16 %v617
    %v714 = vunpack.c.l.b16 %v618
    %v715 = vunpack.c.l.b16 %v619
    %v716 = vunpack.c.l.b16 %v620
    %v717 = vunpack.c.l.b16 %v621
    %v718 = vunpack.c.l.b16 %v622
    %v719 = vunpack.c.l.b16 %v623
    %v720 = vunpack.c.l.b16 %v624
    %v721 = vunpack.c.l.b16 %v625
    %v722 = vunpack.c.l.b16 %v626
    %v723 = vunpack.c.l.b16 %v627
    %v724 = vunpack.c.l.b16 %v628
    %v725 = vunpack.c.l.b16 %v629
    %v726 = vunpack.c.l.b16 %v630
    %v727 = vunpack.c.l.b16 %v631
    %v728 = vunpack.c.l.b16 %v632
    %v729 = vunpack.c.l.b16 %v633
    %v730 = vunpack.c.l.b16 %v634
    %v731 = vunpack.c.l.b16 %v635
    %v732 = vunpack.c.l.b16 %v636
    %v733 = vunpack.c.l.b16 %v637
    %v734 = vpack.c.b16 %v687, %v686
    %v735 = vpack.c.b16 %v689, %v688
    %v736 = vpack.c.b16 %v691, %v690
    %v737 = vpack.c.b16 %v693, %v692
    %v738 = vpack.c.b16 %v695, %v694
    %v739 = vpack.c.b16 %v697, %v696
    %v740 = vpack.c.b16 %v699, %v698
    %v741 = vpack.c.b16 %v701, %v700
    %v742 = vpack.c.b16 %v703, %v702
    %v743 = vpack.c.b16 %v705, %v704
    %v744 = vpack.c.b16 %v707, %v706
    %v745 = vpack.c.b16 %v709, %v708
    %v746 = vpack.c.b16 %v711, %v710
    %v747 = vpack.c.b16 %v713, %v712
    %v748 = vpack.c.b16 %v715, %v714
    %v749 = vpack.c.b16 %v717, %v716
    %v750 = vpack.c.b16 %v719, %v718
    %v751 = vpack.c.b16 %v721, %v720
    %v752 = vpack.c.b16 %v723, %v722
    %v753 = vpack.c.b16 %v725, %v724
    %v754 = vpack.c.b16 %v727, %v726
    %v755 = vpack.c.b16 %v729, %v728
    %v756 = vpack.c.b16 %v731, %v730
    %v757 = vpack.c.b16 %v733, %v732
    %782 = vmatprep.subr.bf16.mxu0 0
    %783 = vmatpush1.bf16.msra.mxu0 %v734
    %784 = vmatprep.subr.bf16.mxu0 0
    %785 = vmatpush1.bf16.msra.mxu0 %v735
    %786 = vmatprep.subr.bf16.mxu0 0
    %787 = vmatpush1.bf16.msra.mxu0 %v736
    %788 = vmatprep.subr.bf16.mxu0 0
    %789 = vmatpush1.bf16.msra.mxu0 %v737
    %790 = vmatprep.subr.bf16.mxu0 0
    %791 = vmatpush1.bf16.msra.mxu0 %v738
    %792 = vmatprep.subr.bf16.mxu0 0
    %793 = vmatpush1.bf16.msra.mxu0 %v739
    %794 = vmatprep.subr.bf16.mxu0 0
    %795 = vmatpush1.bf16.msra.mxu0 %v740
    %796 = vmatprep.subr.bf16.mxu0 0
    %797 = vmatpush1.bf16.msra.mxu0 %v741
    %798 = vmatprep.subr.bf16.mxu0 0
    %799 = vmatpush1.bf16.msra.mxu0 %v742
    %800 = vmatprep.subr.bf16.mxu0 0
    %801 = vmatpush1.bf16.msra.mxu0 %v743
    %802 = vmatprep.subr.bf16.mxu0 0
    %803 = vmatpush1.bf16.msra.mxu0 %v744
    %804 = vmatprep.subr.bf16.mxu0 0
    %805 = vmatpush1.bf16.msra.mxu0 %v745
    %806 = vmatprep.subr.bf16.mxu0 0
    %807 = vmatpush1.bf16.msra.mxu0 %v746
    %808 = vmatprep.subr.bf16.mxu0 0
    %809 = vmatpush1.bf16.msra.mxu0 %v747
    %810 = vmatprep.subr.bf16.mxu0 0
    %811 = vmatpush1.bf16.msra.mxu0 %v748
    %812 = vmatprep.subr.bf16.mxu0 0
    %813 = vmatpush1.bf16.msra.mxu0 %v749
    %814 = vmatprep.mubr.bf16.mxu0 %v585
    %815 = vmatmul.mubr.bf16.gmra.mrb[0].mxu0 %v584
    %v816 = vpop.f32.mrb[0].mxu0
    %v817 = vadd.f32 0.0, %v816
    %v818 = vpop.f32.mrb[0].mxu0
    %v819 = vpop.f32.mrb[0].mxu0
    %v820 = vadd.f32 0.0, %v819
    %v821 = vpop.f32.mrb[0].mxu0
    %822 = vmatprep.mubr.bf16.mxu0 %v588
    %823 = vmatmul.mubr.bf16.gmra.mrb[0].mxu0 %v587
    %v824 = vpop.f32.mrb[0].mxu0
    %v825 = vadd.f32 0.0, %v824
    %v826 = vpop.f32.mrb[0].mxu0
    %v827 = vpop.f32.mrb[0].mxu0
    %v828 = vadd.f32 0.0, %v827
    %v829 = vpop.f32.mrb[0].mxu0
    %830 = vdwg.mxu0
    %831 = vmatprep.subr.bf16.mxu0 0
    %832 = vmatpush1.bf16.msra.mxu0 %v750
    %833 = vmatprep.subr.bf16.mxu0 0
    %834 = vmatpush1.bf16.msra.mxu0 %v751
    %835 = vmatprep.subr.bf16.mxu0 0
    %836 = vmatpush1.bf16.msra.mxu0 %v752
    %837 = vmatprep.subr.bf16.mxu0 0
    %838 = vmatpush1.bf16.msra.mxu0 %v753
    %839 = vmatprep.subr.bf16.mxu0 0
    %840 = vmatpush1.bf16.msra.mxu0 %v754
    %841 = vmatprep.subr.bf16.mxu0 0
    %842 = vmatpush1.bf16.msra.mxu0 %v755
    %843 = vmatprep.subr.bf16.mxu0 0
    %844 = vmatpush1.bf16.msra.mxu0 %v756
    %845 = vmatprep.subr.bf16.mxu0 0
    %846 = vmatpush1.bf16.msra.mxu0 %v757
    %847 = vmatprep.subr.bf16.mxu0 0
    %848 = vmatpush1.bf16.msra.mxu0 0
    %849 = vmatprep.subr.bf16.mxu0 0
    %850 = vmatpush1.bf16.msra.mxu0 0
    %851 = vmatprep.subr.bf16.mxu0 0
    %852 = vmatpush1.bf16.msra.mxu0 0
    %853 = vmatprep.subr.bf16.mxu0 0
    %854 = vmatpush1.bf16.msra.mxu0 0
    %855 = vmatprep.subr.bf16.mxu0 0
    %856 = vmatpush1.bf16.msra.mxu0 0
    %857 = vmatprep.subr.bf16.mxu0 0
    %858 = vmatpush1.bf16.msra.mxu0 0
    %859 = vmatprep.subr.bf16.mxu0 0
    %860 = vmatpush1.bf16.msra.mxu0 0
    %861 = vmatprep.subr.bf16.mxu0 0
    %862 = vmatpush1.bf16.msra.mxu0 0
    %863 = vmatprep.mubr.bf16.mxu0 0
    %864 = vmatmul.mubr.bf16.gmra.mrb[0].mxu0 %v586
    %v865 = vpop.f32.mrb[0].mxu0
    %v866 = vadd.f32 %v817, %v865
    %v867 = vpop.f32.mrb[0].mxu0
    %v868 = vpop.f32.mrb[0].mxu0
    %v869 = vadd.f32 %v820, %v868
    %v870 = vpop.f32.mrb[0].mxu0
    %871 = vmatprep.mubr.bf16.mxu0 0
    %872 = vmatmul.mubr.bf16.gmra.mrb[0].mxu0 %v589
    %v873 = vpop.f32.mrb[0].mxu0
    %v874 = vadd.f32 %v825, %v873
    %v875 = vpop.f32.mrb[0].mxu0
    %v876 = vpop.f32.mrb[0].mxu0
    %v877 = vadd.f32 %v828, %v876
    %v878 = vpop.f32.mrb[0].mxu0
    %879 = vdwg.mxu0
    %p880 = scmp.eq.s32.totalorder 0, 0
    // Predicated region
    $region38: #{tpu_custom_call.1} parent=1 // pred_check
      %p881 = pneg %p880
    $region39: #{tpu_custom_call.1} parent=1 // pred_check_branch
      %883 = sbr.rel (%p881) target = $region41
    $region40: #{tpu_custom_call.1} parent=1 // pred_region
      %v884 = vld [vmem:[%s5] sm:$0x1]
      %v886 = vlaneseq
      %v887 = vshrl.u32 %v886, 7
      %v888 = vsub.s32 0, %v887
      %v889 = vrot.slane %v884, %v888
      %v891 = vadd.f32 %v866, %v889
      %v892 = vadd.f32 %v869, %v889
      %v893 = vadd.f32 %v874, %v889
      %v894 = vadd.f32 %v877, %v889
      %895 = vst [vmem:[#allocation8] sm:$0xff] %v891
      %896 = vst [vmem:[#allocation8 + $0x8] sm:$0xff] %v892
      %897 = vst [vmem:[#allocation8 + $0x10] sm:$0xff] %v893
      %898 = vst [vmem:[#allocation8 + $0x18] sm:$0xff] %v894
    $region41: #{tpu_custom_call.1} parent=1 // pred_fallthru
      _
    %p899 = scmp.ne.s32.totalorder 0, 0
    // Predicated region
    $region42: #{tpu_custom_call.1} parent=1 // pred_check
      %p900 = pneg %p899
    $region43: #{tpu_custom_call.1} parent=1 // pred_check_branch
      %902 = sbr.rel (%p900) target = $region45
    $region44: #{tpu_custom_call.1} parent=1 // pred_region
      %v903 = vld [vmem:[#allocation8] sm:$0xff]
      %v904 = vld [vmem:[#allocation8 + $0x8] sm:$0xff]
      %v905 = vld [vmem:[#allocation8 + $0x10] sm:$0xff]
      %v906 = vld [vmem:[#allocation8 + $0x18] sm:$0xff]
      %v907 = vadd.f32 %v903, %v866
      %v908 = vadd.f32 %v904, %v869
      %v909 = vadd.f32 %v905, %v874
      %v910 = vadd.f32 %v906, %v877
      %911 = vst [vmem:[#allocation8] sm:$0xff] %v907
      %912 = vst [vmem:[#allocation8 + $0x8] sm:$0xff] %v908
      %913 = vst [vmem:[#allocation8 + $0x10] sm:$0xff] %v909
      %914 = vst [vmem:[#allocation8 + $0x18] sm:$0xff] %v910
    $region45: #{tpu_custom_call.1} parent=1 // pred_fallthru
      _
    // Predicated region
    $region46: #{tpu_custom_call.1} parent=1 // pred_check
      _
    $region47: #{tpu_custom_call.1} parent=1 // pred_check_branch
      %916 = sbr.rel (0) target = $region49
    $region48: #{tpu_custom_call.1} parent=1 // pred_region
      %s918 = ssub.s32 512, 512
      %919 = vsyncadd [#allocation4], %s918
      %s920 = sshll.u32 [#allocation8], 4
      %s921 = int_to_ptr.vmem [resolvable:$true] %s920
      %926 = dma.vmem_to_hbm [thread:$0]  %s921, 512, %s6, [#allocation4], 128, 128, 8
    $region49: #{tpu_custom_call.1} parent=1 // pred_fallthru
      _
    // Predicated region
    $region50: #{tpu_custom_call.1} parent=1 // pred_check
      _
    $region51: #{tpu_custom_call.1} parent=1 // pred_check_branch
      %928 = sbr.rel (0) target = $region53
    $region52: #{tpu_custom_call.1} parent=1 // pred_region
      %929 = dma.done [#allocation4], 512
    $region53: #{tpu_custom_call.1} parent=1 // pred_fallthru
      _
    %930 = vsyncpa [#allocation3], 1
    %931 = vsyncpa [#allocation6], 1
    %932 = vsyncpa [#allocation4], 1

</llo_original>
